<compile_context>
chip_gen: v5e
topology: v5e:2x2
jax: 0.10.0
libtpu: 0.0.40
codegen_flags: <defaults>
</compile_context>

<pallas_src>
import functools

import jax
import jax.numpy as jnp
from jax.experimental import pallas as pl
from jax.experimental.pallas import tpu as pltpu

BN_EPS = 1e-5
_VMEM_LIMIT = 48 * 1024 * 1024              # <= v7x physical VMEM (64 MiB), headroom kept
_VMEM_SPEC = pl.BlockSpec(memory_space=pltpu.MemorySpace.VMEM)


def _round_up(x, m):
    return (x + m - 1) // m * m


def _pick_tk(K, max_tk=512):
    """K-tile: full K when small, else largest multiple of 128 (<= max_tk) dividing K."""
    if K <= max_tk:
        return K
    tk = (max_tk // 128) * 128
    while tk >= 128:
        if K % tk == 0:
            return tk
        tk -= 128
    return K


# --------------------------- Pallas kernels ---------------------------------

def _matmul_bias_kernel(x_ref, w_ref, b_ref, *rest, relu, residual):
    """Gridded (M, K) matmul: acc += x@w over K; bias/residual/ReLU epilogue at last K."""
    if residual:
        r_ref, o_ref, acc_ref = rest
    else:
        o_ref, acc_ref = rest
    k = pl.program_id(1)

    @pl.when(k == 0)
    def _():
        acc_ref[...] = jnp.zeros_like(acc_ref)

    acc_ref[...] += jnp.dot(x_ref[...], w_ref[...],
                            preferred_element_type=jnp.float32)

    @pl.when(k == pl.num_programs(1) - 1)
    def _():
        acc = acc_ref[...] + b_ref[...]                 # bias is f32 (1, N)
        if residual:
            acc = acc + r_ref[...].astype(jnp.float32)  # residual add in f32
        if relu:
            acc = jnp.maximum(acc, 0.0)
        o_ref[...] = acc.astype(o_ref.dtype)


def _maxpool_kernel(p_ref, o_ref):
    """p_ref: (9, tm, C) window taps with the reduce axis leading -> max over taps."""
    o_ref[...] = jnp.max(p_ref[...], axis=0)


def _avgpool_kernel(x_ref, o_ref):
    """x_ref: (N, HW, C) -> mean over HW (global average pool), f32 accumulation."""
    o_ref[...] = jnp.mean(x_ref[...].astype(jnp.float32), axis=1)


# --------------------------- Pallas wrappers --------------------------------

def pallas_matmul_bias(x, w, b, residual=None, relu=False, out_dtype=jnp.bfloat16):
    """out = [relu](x @ w + b [+ residual]); bf16 operands, f32 accumulate, gridded."""
    M, K = x.shape
    Kw, N = w.shape
    assert K == Kw
    x = x.astype(jnp.bfloat16)
    w = w.astype(jnp.bfloat16)

    tm = min(256, _round_up(M, 8))
    Mp = _round_up(M, tm)
    if Mp != M:
        x = jnp.pad(x, ((0, Mp - M), (0, 0)))
    tk = _pick_tk(K)
    grid = (Mp // tm, K // tk)

    args = [x, w, b]
    in_specs = [
        pl.BlockSpec((tm, tk), lambda i, k: (i, k)),
        pl.BlockSpec((tk, N), lambda i, k: (k, 0)),
        pl.BlockSpec((1, N), lambda i, k: (0, 0)),
    ]
    if residual is not None:
        r = residual.astype(jnp.bfloat16)
        if Mp != M:
            r = jnp.pad(r, ((0, Mp - M), (0, 0)))
        args.append(r)
        in_specs.append(pl.BlockSpec((tm, N), lambda i, k: (i, 0)))

    kernel = functools.partial(_matmul_bias_kernel, relu=relu,
                               residual=residual is not None)
    out = pl.pallas_call(
        kernel,
        out_shape=jax.ShapeDtypeStruct((Mp, N), out_dtype),
        grid=grid,
        in_specs=in_specs,
        out_specs=pl.BlockSpec((tm, N), lambda i, k: (i, 0)),
        scratch_shapes=[pltpu.VMEM((tm, N), jnp.float32)],
        compiler_params=pltpu.CompilerParams(
            dimension_semantics=("parallel", "arbitrary"),
            vmem_limit_bytes=_VMEM_LIMIT),
    )(*args)
    return out[:M] if Mp != M else out


def _window_slices(x, kh, kw, stride, pad, pad_value=0.0):
    """x: (N,H,W,C) NHWC -> list of kh*kw shifted/strided (N,Ho,Wo,C) slices."""
    if pad > 0:
        x = jnp.pad(x, ((0, 0), (pad, pad), (pad, pad), (0, 0)),
                    constant_values=pad_value)
    N, H, W, C = x.shape
    Ho = (H - kh) // stride + 1
    Wo = (W - kw) // stride + 1
    cols = []
    for i in range(kh):
        for j in range(kw):
            cols.append(jax.lax.slice(
                x, (0, i, j, 0),
                (N, i + (Ho - 1) * stride + 1, j + (Wo - 1) * stride + 1, C),
                (1, stride, stride, 1)))
    return cols, (N, Ho, Wo, C)


def conv2d_bn(x, w_mat, b, ksize, stride, pad, relu=False, residual=None):
    """PyTorch-equivalent Conv2d (cross-correlation) + folded BN (+res, +ReLU)."""
    cols, (N, Ho, Wo, C) = _window_slices(x, ksize, ksize, stride, pad)
    # tap-major K ordering (i, j, c_in) matches the pre-folded weight layout.
    p = jnp.stack(cols, axis=3).reshape(N * Ho * Wo, ksize * ksize * C)
    res = residual.reshape(N * Ho * Wo, -1) if residual is not None else None
    out = pallas_matmul_bias(p, w_mat, b, residual=res, relu=relu)
    return out.reshape(N, Ho, Wo, -1)


def maxpool_3x3_s2(x):
    """MaxPool2d(kernel_size=3, stride=2, padding=1); padding acts as -inf."""
    cols, (N, Ho, Wo, C) = _window_slices(x, 3, 3, 2, 1, pad_value=float("-inf"))
    M = N * Ho * Wo
    p = jnp.stack(cols, axis=0).reshape(9, M, C)      # reduce axis leading, (M,C) lane-dense
    tm = min(512, _round_up(M, 8))
    Mp = _round_up(M, tm)
    if Mp != M:
        p = jnp.pad(p, ((0, 0), (0, Mp - M), (0, 0)))
    out = pl.pallas_call(
        _maxpool_kernel,
        out_shape=jax.ShapeDtypeStruct((Mp, C), x.dtype),
        grid=(Mp // tm,),
        in_specs=[pl.BlockSpec((9, tm, C), lambda i: (0, i, 0))],
        out_specs=pl.BlockSpec((tm, C), lambda i: (i, 0)),
        compiler_params=pltpu.CompilerParams(
            dimension_semantics=("parallel",),
            vmem_limit_bytes=_VMEM_LIMIT),
    )(p)
    out = out[:M] if Mp != M else out
    return out.reshape(N, Ho, Wo, C)


def global_avg_pool(x):
    N, H, W, C = x.shape
    return pl.pallas_call(
        _avgpool_kernel,
        out_shape=jax.ShapeDtypeStruct((N, C), jnp.float32),
        in_specs=[_VMEM_SPEC],
        out_specs=_VMEM_SPEC,
        compiler_params=pltpu.CompilerParams(vmem_limit_bytes=_VMEM_LIMIT),
    )(x.reshape(N, H * W, C))


# --------------------------- parameter construction -------------------------

def _fold_bn(w, gamma, beta, mean, var):
    """Fold eval-mode BN into conv; emit matmul-ready bf16 weights + f32 (1,Cout) bias.
    w: (Cout,Cin,kh,kw) PyTorch layout -> (kh*kw*Cin, Cout) matching im2col ordering."""
    scale = gamma / jnp.sqrt(var + BN_EPS)
    w = w * scale[:, None, None, None]
    b = beta - mean * scale
    c_out, c_in, kh, kw = w.shape
    w_mat = jnp.transpose(w, (2, 3, 1, 0)).reshape(kh * kw * c_in, c_out)
    return w_mat.astype(jnp.bfloat16), b.reshape(1, c_out).astype(jnp.float32)


def _conv_bn_params(key, c_in, c_out, k):
    k1, k2, k3, k4, k5 = jax.random.split(key, 5)
    fan_in = c_in * k * k
    w = jax.random.normal(k1, (c_out, c_in, k, k), jnp.float32) * (2.0 / fan_in) ** 0.5
    gamma = 1.0 + 0.1 * jax.random.normal(k2, (c_out,), jnp.float32)
    beta = 0.1 * jax.random.normal(k3, (c_out,), jnp.float32)
    mean = 0.1 * jax.random.normal(k4, (c_out,), jnp.float32)
    var = 0.5 + jax.random.uniform(k5, (c_out,), jnp.float32)
    return _fold_bn(w, gamma, beta, mean, var)


def make_params(key, num_classes=2):
    """ResNet-34: stem 7x7/2 + maxpool, stages [3,4,6,3] BasicBlocks, fc 512->num_classes."""
    stage_cfg = [(64, 3, 1), (128, 4, 2), (256, 6, 2), (512, 3, 2)]
    params = {}
    key, sub = jax.random.split(key)
    params["stem"] = _conv_bn_params(sub, 3, 64, 7)
    layers = []
    c_in = 64
    for c_out, n_blocks, stride in stage_cfg:
        blocks = []
        for b_idx in range(n_blocks):
            s = stride if b_idx == 0 else 1
            blk = {"stride": s}
            key, k1 = jax.random.split(key)
            blk["conv1"] = _conv_bn_params(k1, c_in, c_out, 3)
            key, k2 = jax.random.split(key)
            blk["conv2"] = _conv_bn_params(k2, c_out, c_out, 3)
            if s != 1 or c_in != c_out:
                key, k3 = jax.random.split(key)
                blk["down"] = _conv_bn_params(k3, c_in, c_out, 1)
            blocks.append(blk)
            c_in = c_out
        layers.append(blocks)
    params["layers"] = layers
    key, kf1, kf2 = jax.random.split(key, 3)
    bound = 1.0 / (512 ** 0.5)
    params["fc_w"] = jax.random.uniform(
        kf1, (512, num_classes), jnp.float32, -bound, bound).astype(jnp.bfloat16)
    params["fc_b"] = jax.random.uniform(
        kf2, (num_classes,), jnp.float32, -bound, bound).reshape(1, num_classes)
    return params


# --------------------------- forward pass ------------------------------------

def quantize_train_model_forward(x_nchw, params):
    # quant stub: identity
    x = jnp.transpose(x_nchw, (0, 2, 3, 1)).astype(jnp.bfloat16)   # NCHW -> NHWC
    w, b = params["stem"]
    x = conv2d_bn(x, w, b, ksize=7, stride=2, pad=3, relu=True)    # conv1+bn1+act1
    x = maxpool_3x3_s2(x)
    for blocks in params["layers"]:
        for blk in blocks:
            identity = x
            w1, b1 = blk["conv1"]
            out = conv2d_bn(x, w1, b1, 3, blk["stride"], 1, relu=True)
            if "down" in blk:
                wd, bd = blk["down"]
                identity = conv2d_bn(x, wd, bd, 1, blk["stride"], 0, relu=False)
            w2, b2 = blk["conv2"]
            # conv2 + bn2, residual add, final ReLU fused in one gridded Pallas kernel
            x = conv2d_bn(out, w2, b2, 3, 1, 1, relu=True, residual=identity)
    x = global_avg_pool(x)                                          # (N, 512) f32
    logits = pallas_matmul_bias(x, params["fc_w"], params["fc_b"],
                                relu=False, out_dtype=jnp.float32)  # (N, num_classes)
    # dequant stub: identity
    return logits


if __name__ == "__main__":
    key = jax.random.PRNGKey(0)
    pkey, xkey = jax.random.split(key)
    params = make_params(pkey, num_classes=2)
    # PyTorch-convention NCHW input (small spatial size: 32x32, batch 2, 3 channels)
    x = jax.random.normal(xkey, (2, 3, 32, 32), jnp.float32)
    logits = quantize_train_model_forward(x, params)
    jax.block_until_ready(logits)
    assert logits.shape == (2, 2) and logits.dtype == jnp.float32
    print("KERNEL_OK")
</pallas_src>

<mosaic_0001>
module attributes {stable_mosaic.version = 11 : i64} {
  func.func @_matmul_bias_kernel(%arg0: i32, %arg1: i32, %arg2: memref<256x147xbf16, #tpu.memory_space<vmem>>, %arg3: memref<147x64xbf16, #tpu.memory_space<vmem>>, %arg4: memref<1x64xf32, #tpu.memory_space<vmem>>, %arg5: memref<256x64xbf16, #tpu.memory_space<vmem>>, %arg6: memref<256x64xf32, #tpu.memory_space<vmem>>) attributes {dimension_semantics = [#tpu.dimension_semantics<parallel>, #tpu.dimension_semantics<arbitrary>], iteration_bounds = array<i64: 2, 1>, scalar_prefetch = 0 : i64, scratch_operands = 1 : i64, tpu.core_type = #tpu.core_type<tc>, window_params = [{transform_indices = @transform_0, window_bounds = array<i64: 256, 147>}, {transform_indices = @transform_1, window_bounds = array<i64: 147, 64>}, {pipeline_mode = #tpu.pipeline_mode<synchronous>, transform_indices = @transform_2, window_bounds = array<i64: 1, 64>}, {transform_indices = @transform_3, window_bounds = array<i64: 256, 64>}]} {
    %c0_i32 = arith.constant 0 : i32
    %0 = arith.cmpi eq, %arg1, %c0_i32 : i32
    %1 = arith.extui %0 : i1 to i32
    %c0_i32_0 = arith.constant 0 : i32
    %2 = arith.cmpi ne, %1, %c0_i32_0 : i32
    scf.if %2 {
      %cst_10 = arith.constant 0.000000e+00 : f32
      %12 = vector.broadcast %cst_10 : f32 to vector<256x64xf32>
      %c0_11 = arith.constant 0 : index
      %c0_12 = arith.constant 0 : index
      %13 = vector.load %arg6[%c0_11, %c0_12] : memref<256x64xf32, #tpu.memory_space<vmem>>, vector<256x64xf32>
      tpu.vector_store %arg6[%c0_11, %c0_12], %12 {strides = array<i32>} : memref<256x64xf32, #tpu.memory_space<vmem>>, vector<256x64xf32>,
    } else {
    }
    %c0 = arith.constant 0 : index
    %c0_1 = arith.constant 0 : index
    %3 = vector.load %arg6[%c0, %c0_1] : memref<256x64xf32, #tpu.memory_space<vmem>>, vector<256x64xf32>
    %c0_2 = arith.constant 0 : index
    %c0_3 = arith.constant 0 : index
    %4 = vector.load %arg2[%c0_2, %c0_3] : memref<256x147xbf16, #tpu.memory_space<vmem>>, vector<256x147xbf16>
    %c0_4 = arith.constant 0 : index
    %c0_5 = arith.constant 0 : index
    %5 = vector.load %arg3[%c0_4, %c0_5] : memref<147x64xbf16, #tpu.memory_space<vmem>>, vector<147x64xbf16>
    %cst = arith.constant dense<0.000000e+00> : vector<256x64xf32>
    %6 = tpu.matmul %4, %5, %cst {dimension_numbers = #tpu.dot_dimension_numbers<[1], [0], [0], [1], [0, 0, 1, 1], [], []>} : vector<256x147xbf16>, vector<147x64xbf16>, vector<256x64xf32> -> vector<256x64xf32>
    %7 = arith.addf %3, %6 : vector<256x64xf32>
    %c0_6 = arith.constant 0 : index
    %c0_7 = arith.constant 0 : index
    %8 = vector.load %arg6[%c0_6, %c0_7] : memref<256x64xf32, #tpu.memory_space<vmem>>, vector<256x64xf32>
    tpu.vector_store %arg6[%c0_6, %c0_7], %7 {strides = array<i32>} : memref<256x64xf32, #tpu.memory_space<vmem>>, vector<256x64xf32>,
    %c0_i32_8 = arith.constant 0 : i32
    %9 = arith.cmpi eq, %arg1, %c0_i32_8 : i32
    %10 = arith.extui %9 : i1 to i32
    %c0_i32_9 = arith.constant 0 : i32
    %11 = arith.cmpi ne, %10, %c0_i32_9 : i32
    scf.if %11 {
      %c0_10 = arith.constant 0 : index
      %c0_11 = arith.constant 0 : index
      %12 = vector.load %arg6[%c0_10, %c0_11] : memref<256x64xf32, #tpu.memory_space<vmem>>, vector<256x64xf32>
      %c0_12 = arith.constant 0 : index
      %c0_13 = arith.constant 0 : index
      %13 = vector.load %arg4[%c0_12, %c0_13] : memref<1x64xf32, #tpu.memory_space<vmem>>, vector<1x64xf32>
      %14 = vector.broadcast %13 : vector<1x64xf32> to vector<256x64xf32>
      %15 = arith.addf %12, %14 : vector<256x64xf32>
      %cst_14 = arith.constant 0.000000e+00 : f32
      %16 = vector.broadcast %cst_14 : f32 to vector<256x64xf32>
      %17 = arith.maximumf %15, %16 : vector<256x64xf32>
      %18 = arith.truncf %17 : vector<256x64xf32> to vector<256x64xbf16>
      %c0_15 = arith.constant 0 : index
      %c0_16 = arith.constant 0 : index
      %19 = vector.load %arg5[%c0_15, %c0_16] : memref<256x64xbf16, #tpu.memory_space<vmem>>, vector<256x64xbf16>
      tpu.vector_store %arg5[%c0_15, %c0_16], %18 {strides = array<i32>} : memref<256x64xbf16, #tpu.memory_space<vmem>>, vector<256x64xbf16>,
    } else {
    }
    return
  }
  func.func @transform_0(%arg0: i32, %arg1: i32) -> (i32, i32) {
    %c0_i32 = arith.constant 0 : i32
    return %arg0, %arg1 : i32, i32
  }
  func.func @transform_1(%arg0: i32, %arg1: i32) -> (i32, i32) {
    %c0_i32 = arith.constant 0 : i32
    %c0_i32_0 = arith.constant 0 : i32
    return %arg1, %c0_i32 : i32, i32
  }
  func.func @transform_2(%arg0: i32, %arg1: i32) -> (i32, i32) {
    %c0_i32 = arith.constant 0 : i32
    %c0_i32_0 = arith.constant 0 : i32
    %c0_i32_1 = arith.constant 0 : i32
    return %c0_i32, %c0_i32_0 : i32, i32
  }
  func.func @transform_3(%arg0: i32, %arg1: i32) -> (i32, i32) {
    %c0_i32 = arith.constant 0 : i32
    %c0_i32_0 = arith.constant 0 : i32
    return %arg0, %c0_i32 : i32, i32
  }
}

</mosaic_0001>

<llo_original>
// kernel: tpu_custom_call.1
$region0: #{tpu_custom_call.1}
  #allocation0 [shape = 'u32[]', space=smem, size = 0x4, offset = 0x4, fixed_abs, tag = 'smem constant byte address 0x4 - core index']
  #allocation1 [shape = 'u32[72,128]{1,0:T(1,128)}', space=vmem, size = 0x9000, scoped, tag = 'internal scratch']
  #allocation2 [shape = 'f32[256,64]{1,0:T(8,128)}', space=vmem, size = 0x20000, scoped, tag = 'scratch operand']
  %s0 = inlined_call_operand.vmem [shape: bf16[512,147], index: 0, kind: input, shape index: {}]
  %s1 = inlined_call_operand.vmem [shape: bf16[147,64], index: 1, kind: input, shape index: {}]
  %s2 = inlined_call_operand.vmem [shape: f32[1,64], index: 2, kind: input, shape index: {}]
  %s3 = inlined_call_operand.vmem [shape: bf16[512,64], index: 3, kind: output, shape index: {}]
  %s4 = sld [smem:[#allocation0]]
  $region53: #{tpu_custom_call.1} parent=0
    _
  %s6 = ssub.s32 1, %s4
  %s7 = scalar_select 0, %s6, %s4
  loop: start=0, step=1, limit=4
  $region2: #{tpu_custom_call.1} parent=0 // loop_pre_header
    _
  $region3: #{tpu_custom_call.1} parent=0 // loop_header
    %s9 = sphi 0, %s13
    %p10 = scmp.ge.s32.totalorder %s9, 4
    %s16 = sphi 0, %s28
    %s17 = sphi 0, %s24
    %s18 = sphi 0, %s16
    %s19 = sphi 0, %s17
    %s20 = sphi 0, %s18
    %s21 = sphi 0, %s19
    %s33 = sphi 0, %s35
    %s36 = sphi 0, %s33
    %s37 = sphi 0, %s36
    %s53 = sphi 0, %s37
    %s59 = sphi 0, %s61
    %s62 = sphi 0, %s59
    %s63 = sphi 0, %s62
    %s79 = sphi 0, %s63
    %s83 = sphi 0, %s83
    %s85 = sphi 0, %s83
    %s86 = sphi 0, %s85
    %s100 = sphi 0, %s86
    %s106 = sphi 0, %s108
    %s109 = sphi 0, %s106
    %s110 = sphi 0, %s109
    %s126 = sphi 0, %s110
  $region4: #{tpu_custom_call.1} parent=0 // loop_header_branch
    %12 = sbr.rel (%p10) target = $region8
  $region5: #{tpu_custom_call.1} parent=0 // loop_body
    %s14 = ssub.s32 %s9, 1
    %s15 = ssub.s32 %s9, 2
    %s22 = sadd.s32 1, %s17
    %p23 = scmp.ge.s32.totalorder %s22, 1
    %s24 = scalar_select %p23, 0, %s22
    %s25 = sadd.s32 1, %s16
    %s26 = scalar_select %p23, %s25, %s16
    %p27 = scmp.ge.s32.totalorder %s26, 2
    %s28 = scalar_select %p27, 0, %s26
    %s29 = ssub.s32 %s16, %s28
    %s30 = ssub.s32 %s17, %s24
    %s31 = sor.u32 %s29, %s30
    %p32 = scmp.eq.s32.totalorder %s31, 0
    %s34 = sadd.s32 %s33, 1
    %s35 = scalar_select %p32, %s33, %s34
    %p38 = pneg %p32
    %p39 = scmp.eq.s32.totalorder %s9, 1
    %p40 = por %p38, %p39
    %p41 = scmp.ne.s32.totalorder %s33, %s36
    %p42 = scmp.eq.s32.totalorder %s9, 0
    %p43 = por %p41, %p42
    %p44 = scmp.ne.s32.totalorder %s33, %s36
    %p45 = scmp.eq.s32.totalorder %s14, 1
    %p46 = por %p44, %p45
    %p47 = scmp.ne.s32.totalorder %s36, %s37
    %p48 = scmp.eq.s32.totalorder %s14, 0
    %p49 = por %p47, %p48
    %p50 = scmp.ne.s32.totalorder %s36, %s37
    %p51 = scmp.eq.s32.totalorder %s15, 1
    %p52 = por %p50, %p51
    %p54 = scmp.ne.s32.totalorder %s37, %s53
    %p55 = scmp.eq.s32.totalorder %s15, 0
    %p56 = por %p54, %p55
    %s57 = ssub.s32 %s17, %s24
    %p58 = scmp.eq.s32.totalorder %s57, 0
    %s60 = sadd.s32 %s59, 1
    %s61 = scalar_select %p58, %s59, %s60
    %p64 = pneg %p58
    %p65 = scmp.eq.s32.totalorder %s9, 1
    %p66 = por %p64, %p65
    %p67 = scmp.ne.s32.totalorder %s59, %s62
    %p68 = scmp.eq.s32.totalorder %s9, 0
    %p69 = por %p67, %p68
    %p70 = scmp.ne.s32.totalorder %s59, %s62
    %p71 = scmp.eq.s32.totalorder %s14, 1
    %p72 = por %p70, %p71
    %p73 = scmp.ne.s32.totalorder %s62, %s63
    %p74 = scmp.eq.s32.totalorder %s14, 0
    %p75 = por %p73, %p74
    %p76 = scmp.ne.s32.totalorder %s62, %s63
    %p77 = scmp.eq.s32.totalorder %s15, 1
    %p78 = por %p76, %p77
    %p80 = scmp.ne.s32.totalorder %s63, %s79
    %p81 = scmp.eq.s32.totalorder %s15, 0
    %p82 = por %p80, %p81
    %s84 = sadd.s32 %s83, 1
    %p87 = scmp.eq.s32.totalorder %s9, 1
    %p88 = scmp.ne.s32.totalorder %s83, %s85
    %p89 = scmp.eq.s32.totalorder %s9, 0
    %p90 = por %p88, %p89
    %p91 = scmp.ne.s32.totalorder %s83, %s85
    %p92 = scmp.eq.s32.totalorder %s14, 1
    %p93 = por %p91, %p92
    %p94 = scmp.ne.s32.totalorder %s85, %s86
    %p95 = scmp.eq.s32.totalorder %s14, 0
    %p96 = por %p94, %p95
    %p97 = scmp.ne.s32.totalorder %s85, %s86
    %p98 = scmp.eq.s32.totalorder %s15, 1
    %p99 = por %p97, %p98
    %p101 = scmp.ne.s32.totalorder %s86, %s100
    %p102 = scmp.eq.s32.totalorder %s15, 0
    %p103 = por %p101, %p102
    %s104 = ssub.s32 %s16, %s28
    %p105 = scmp.eq.s32.totalorder %s104, 0
    %s107 = sadd.s32 %s106, 1
    %s108 = scalar_select %p105, %s106, %s107
    %p111 = pneg %p105
    %p112 = scmp.eq.s32.totalorder %s9, 1
    %p113 = por %p111, %p112
    %p114 = scmp.ne.s32.totalorder %s106, %s109
    %p115 = scmp.eq.s32.totalorder %s9, 0
    %p116 = por %p114, %p115
    %p117 = scmp.ne.s32.totalorder %s106, %s109
    %p118 = scmp.eq.s32.totalorder %s14, 1
    %p119 = por %p117, %p118
    %p120 = scmp.ne.s32.totalorder %s109, %s110
    %p121 = scmp.eq.s32.totalorder %s14, 0
    %p122 = por %p120, %p121
    %p123 = scmp.ne.s32.totalorder %s109, %s110
    %p124 = scmp.eq.s32.totalorder %s15, 1
    %p125 = por %p123, %p124
    %p127 = scmp.ne.s32.totalorder %s110, %s126
    %p128 = scmp.eq.s32.totalorder %s15, 0
    %p129 = por %p127, %p128
    %p130 = scmp.le.s32.totalorder 1, %s9
    %p131 = scmp.lt.s32.totalorder %s9, 3
    %p132 = pnand %p130, %p131
    %p133 = pneg %p132
    // Predicated region
    $region9: #{tpu_custom_call.1} parent=5 // pred_check
      _
    $region10: #{tpu_custom_call.1} parent=5 // pred_check_branch
      %135 = sbr.rel (%p132) target = $region12
    $region11: #{tpu_custom_call.1} parent=5 // pred_region
      %s136 = ssub.s32 %s9, 1
      // Predicated region
      $region13: #{tpu_custom_call.1} parent=11 // pred_check
        %p137 = pneg %p75
      $region14: #{tpu_custom_call.1} parent=11 // pred_check_branch
        %139 = sbr.rel (%p137) target = $region16
      $region15: #{tpu_custom_call.1} parent=11 // pred_region
        %s140 = smul.u32 19, %s19
        %p141 = scmp.lt.s32.totalorder %s140, 18
        %s142 = scalar_select %p141, %s140, 18
        %s143 = smul.addr %s142, 4
        %s144 = scalar_lea.vmem %s1, %s143
        %s145 = smul.u32 19, %s19
      $region16: #{tpu_custom_call.1} parent=11 // pred_fallthru
        _
      // Predicated region
      $region17: #{tpu_custom_call.1} parent=11 // pred_check
        %p146 = pneg %p96
      $region18: #{tpu_custom_call.1} parent=11 // pred_check_branch
        %148 = sbr.rel (%p146) target = $region20
      $region19: #{tpu_custom_call.1} parent=11 // pred_region
        _
      $region20: #{tpu_custom_call.1} parent=11 // pred_fallthru
        _
    $region12: #{tpu_custom_call.1} parent=5 // pred_fallthru
      _
    %p149 = scmp.lt.s32.totalorder %s9, 2
    // Predicated region
    $region21: #{tpu_custom_call.1} parent=5 // pred_check
      %p150 = pneg %p149
    $region22: #{tpu_custom_call.1} parent=5 // pred_check_branch
      %152 = sbr.rel (%p150) target = $region24
    $region23: #{tpu_custom_call.1} parent=5 // pred_region
      // Predicated region
      $region25: #{tpu_custom_call.1} parent=23 // pred_check
        %p153 = pneg %p43
      $region26: #{tpu_custom_call.1} parent=23 // pred_check_branch
        %155 = sbr.rel (%p153) target = $region28
      $region27: #{tpu_custom_call.1} parent=23 // pred_region
        %s156 = smul.u32 32, %s16
        %s157 = smul.u32 2, %s17
        %p158 = scmp.lt.s32.totalorder %s156, 63
        %s159 = scalar_select %p158, %s156, 63
        %p160 = scmp.lt.s32.totalorder %s157, 1
        %s161 = scalar_select %p160, %s157, 1
        %s162 = smul.addr %s159, 2
        %s163 = sadd.s32 %s161, %s162
        %s164 = smul.addr %s163, 4
        %s165 = scalar_lea.vmem %s0, %s164
        %s166 = smul.u32 32, %s16
        %s167 = smul.u32 2, %s17
      $region28: #{tpu_custom_call.1} parent=23 // pred_fallthru
        _
    $region24: #{tpu_custom_call.1} parent=5 // pred_fallthru
      _
    %p168 = scmp.le.s32.totalorder 1, %s9
    %p169 = scmp.lt.s32.totalorder %s9, 3
    %p170 = pnand %p168, %p169
    %p171 = pneg %p170
    // Predicated region
    $region29: #{tpu_custom_call.1} parent=5 // pred_check
      _
    $region30: #{tpu_custom_call.1} parent=5 // pred_check_branch
      %173 = sbr.rel (%p170) target = $region32
    $region31: #{tpu_custom_call.1} parent=5 // pred_region
      %s174 = ssub.s32 %s9, 1
      %s175 = smul.u32 32, %s18
      %s176 = smul.u32 2, %s19
      %p177 = scmp.lt.s32.totalorder %s175, 63
      %s178 = scalar_select %p177, %s175, 63
      %p179 = scmp.lt.s32.totalorder %s176, 1
      %s180 = scalar_select %p179, %s176, 1
      %s181 = smul.addr %s178, 2
      %s182 = sadd.s32 %s180, %s181
      %s183 = smul.addr %s182, 4
      %s184 = scalar_lea.vmem %s0, %s183
      %p185 = pneg %p49
      %p186 = pneg %p46
      %s187 = smul.u32 19, %s19
      %p188 = scmp.lt.s32.totalorder %s187, 18
      %s189 = scalar_select %p188, %s187, 18
      %s190 = smul.addr %s189, 4
      %s191 = scalar_lea.vmem %s1, %s190
      %p192 = pneg %p75
      %p193 = pneg %p72
      %p194 = pneg %p96
      %p195 = pneg %p93
      %p196 = pneg %p122
      %p197 = pneg %p119
      %s198 = smul.u32 32, %s18
      %p199 = scmp.lt.s32.totalorder %s198, 63
      %s200 = scalar_select %p199, %s198, 63
      %s201 = smul.addr %s200, 4
      %s202 = scalar_lea.vmem %s3, %s201
      %s203 = smul.u32 32, %s18
      %s204 = smul.u32 2, %s19
      %p205 = scmp.lt.s32.totalorder %s203, 63
      %s206 = scalar_select %p205, %s203, 63
      %p207 = scmp.lt.s32.totalorder %s204, 1
      %s208 = scalar_select %p207, %s204, 1
      %s209 = smul.addr %s206, 2
      %s210 = sadd.s32 %s208, %s209
      %s211 = smul.addr %s210, 4
      %s212 = scalar_lea.vmem %s0, %s211
      %s213 = smul.u32 32, %s18
      %s214 = smul.u32 2, %s19
      %s215 = smul.u32 19, %s19
      %p216 = scmp.lt.s32.totalorder %s215, 18
      %s217 = scalar_select %p216, %s215, 18
      %s218 = smul.addr %s217, 4
      %s219 = scalar_lea.vmem %s1, %s218
      %s220 = smul.u32 19, %s19
      %s221 = smul.u32 32, %s18
      %p222 = scmp.lt.s32.totalorder %s221, 63
      %s223 = scalar_select %p222, %s221, 63
      %s224 = smul.addr %s223, 4
      %s225 = scalar_lea.vmem %s3, %s224
      %s226 = smul.u32 32, %s18
      %p228 = scmp.eq.s32.totalorder %s19, 0
      // Predicated region
      $region33: #{tpu_custom_call.1} parent=31 // pred_check
        %p229 = pneg %p228
      $region34: #{tpu_custom_call.1} parent=31 // pred_check_branch
        %231 = sbr.rel (%p229) target = $region36
      $region35: #{tpu_custom_call.1} parent=31 // pred_region
        %vm232 = vcmask 523264
        %233 = vst.msk [vmem:[#allocation2] sm:$0xff] %vm232, 0.0
        %234 = vst.msk [vmem:[#allocation2 + $0x8] sm:$0xff] %vm232, 0.0
        %235 = vst.msk [vmem:[#allocation2 + $0x10] sm:$0xff] %vm232, 0.0
        %236 = vst.msk [vmem:[#allocation2 + $0x18] sm:$0xff] %vm232, 0.0
        %237 = vst.msk [vmem:[#allocation2 + $0x20] sm:$0xff] %vm232, 0.0
        %238 = vst.msk [vmem:[#allocation2 + $0x28] sm:$0xff] %vm232, 0.0
        %239 = vst.msk [vmem:[#allocation2 + $0x30] sm:$0xff] %vm232, 0.0
        %240 = vst.msk [vmem:[#allocation2 + $0x38] sm:$0xff] %vm232, 0.0
        %241 = vst.msk [vmem:[#allocation2 + $0x40] sm:$0xff] %vm232, 0.0
        %242 = vst.msk [vmem:[#allocation2 + $0x48] sm:$0xff] %vm232, 0.0
        %243 = vst.msk [vmem:[#allocation2 + $0x50] sm:$0xff] %vm232, 0.0
        %244 = vst.msk [vmem:[#allocation2 + $0x58] sm:$0xff] %vm232, 0.0
        %245 = vst.msk [vmem:[#allocation2 + $0x60] sm:$0xff] %vm232, 0.0
        %246 = vst.msk [vmem:[#allocation2 + $0x68] sm:$0xff] %vm232, 0.0
        %247 = vst.msk [vmem:[#allocation2 + $0x70] sm:$0xff] %vm232, 0.0
        %248 = vst.msk [vmem:[#allocation2 + $0x78] sm:$0xff] %vm232, 0.0
        %249 = vst.msk [vmem:[#allocation2 + $0x80] sm:$0xff] %vm232, 0.0
        %250 = vst.msk [vmem:[#allocation2 + $0x88] sm:$0xff] %vm232, 0.0
        %251 = vst.msk [vmem:[#allocation2 + $0x90] sm:$0xff] %vm232, 0.0
        %252 = vst.msk [vmem:[#allocation2 + $0x98] sm:$0xff] %vm232, 0.0
        %253 = vst.msk [vmem:[#allocation2 + $0xa0] sm:$0xff] %vm232, 0.0
        %254 = vst.msk [vmem:[#allocation2 + $0xa8] sm:$0xff] %vm232, 0.0
        %255 = vst.msk [vmem:[#allocation2 + $0xb0] sm:$0xff] %vm232, 0.0
        %256 = vst.msk [vmem:[#allocation2 + $0xb8] sm:$0xff] %vm232, 0.0
        %257 = vst.msk [vmem:[#allocation2 + $0xc0] sm:$0xff] %vm232, 0.0
        %258 = vst.msk [vmem:[#allocation2 + $0xc8] sm:$0xff] %vm232, 0.0
        %259 = vst.msk [vmem:[#allocation2 + $0xd0] sm:$0xff] %vm232, 0.0
        %260 = vst.msk [vmem:[#allocation2 + $0xd8] sm:$0xff] %vm232, 0.0
        %261 = vst.msk [vmem:[#allocation2 + $0xe0] sm:$0xff] %vm232, 0.0
        %262 = vst.msk [vmem:[#allocation2 + $0xe8] sm:$0xff] %vm232, 0.0
        %263 = vst.msk [vmem:[#allocation2 + $0xf0] sm:$0xff] %vm232, 0.0
        %264 = vst.msk [vmem:[#allocation2 + $0xf8] sm:$0xff] %vm232, 0.0
      $region36: #{tpu_custom_call.1} parent=31 // pred_fallthru
        _
      %v265 = vld [vmem:[#allocation2] sm:$0xff]
      %v266 = vld [vmem:[#allocation2 + $0x8] sm:$0xff]
      %v267 = vld [vmem:[#allocation2 + $0x10] sm:$0xff]
      %v268 = vld [vmem:[#allocation2 + $0x18] sm:$0xff]
      %v269 = vld [vmem:[#allocation2 + $0x20] sm:$0xff]
      %v270 = vld [vmem:[#allocation2 + $0x28] sm:$0xff]
      %v271 = vld [vmem:[#allocation2 + $0x30] sm:$0xff]
      %v272 = vld [vmem:[#allocation2 + $0x38] sm:$0xff]
      %v273 = vld [vmem:[#allocation2 + $0x40] sm:$0xff]
      %v274 = vld [vmem:[#allocation2 + $0x48] sm:$0xff]
      %v275 = vld [vmem:[#allocation2 + $0x50] sm:$0xff]
      %v276 = vld [vmem:[#allocation2 + $0x58] sm:$0xff]
      %v277 = vld [vmem:[#allocation2 + $0x60] sm:$0xff]
      %v278 = vld [vmem:[#allocation2 + $0x68] sm:$0xff]
      %v279 = vld [vmem:[#allocation2 + $0x70] sm:$0xff]
      %v280 = vld [vmem:[#allocation2 + $0x78] sm:$0xff]
      %v281 = vld [vmem:[#allocation2 + $0x80] sm:$0xff]
      %v282 = vld [vmem:[#allocation2 + $0x88] sm:$0xff]
      %v283 = vld [vmem:[#allocation2 + $0x90] sm:$0xff]
      %v284 = vld [vmem:[#allocation2 + $0x98] sm:$0xff]
      %v285 = vld [vmem:[#allocation2 + $0xa0] sm:$0xff]
      %v286 = vld [vmem:[#allocation2 + $0xa8] sm:$0xff]
      %v287 = vld [vmem:[#allocation2 + $0xb0] sm:$0xff]
      %v288 = vld [vmem:[#allocation2 + $0xb8] sm:$0xff]
      %v289 = vld [vmem:[#allocation2 + $0xc0] sm:$0xff]
      %v290 = vld [vmem:[#allocation2 + $0xc8] sm:$0xff]
      %v291 = vld [vmem:[#allocation2 + $0xd0] sm:$0xff]
      %v292 = vld [vmem:[#allocation2 + $0xd8] sm:$0xff]
      %v293 = vld [vmem:[#allocation2 + $0xe0] sm:$0xff]
      %v294 = vld [vmem:[#allocation2 + $0xe8] sm:$0xff]
      %v295 = vld [vmem:[#allocation2 + $0xf0] sm:$0xff]
      %v296 = vld [vmem:[#allocation2 + $0xf8] sm:$0xff]
      %v297 = vld [vmem:[%s212] sm:$0xff]
      %v298 = vld [vmem:[%s212 + $0x8] sm:$0xff]
      %v299 = vld [vmem:[%s212 + $0x10] sm:$0xff]
      %v300 = vld [vmem:[%s212 + $0x18] sm:$0xff]
      %v301 = vld [vmem:[%s212 + $0x20] sm:$0xff]
      %v302 = vld [vmem:[%s212 + $0x28] sm:$0xff]
      %v303 = vld [vmem:[%s212 + $0x30] sm:$0xff]
      %v304 = vld [vmem:[%s212 + $0x38] sm:$0xff]
      %v305 = vld [vmem:[%s212 + $0x40] sm:$0xff]
      %v306 = vld [vmem:[%s212 + $0x48] sm:$0xff]
      %v307 = vld [vmem:[%s212 + $0x50] sm:$0xff]
      %v308 = vld [vmem:[%s212 + $0x58] sm:$0xff]
      %v309 = vld [vmem:[%s212 + $0x60] sm:$0xff]
      %v310 = vld [vmem:[%s212 + $0x68] sm:$0xff]
      %v311 = vld [vmem:[%s212 + $0x70] sm:$0xff]
      %v312 = vld [vmem:[%s212 + $0x78] sm:$0xff]
      %v313 = vld [vmem:[%s212 + $0x80] sm:$0xff]
      %v314 = vld [vmem:[%s212 + $0x88] sm:$0xff]
      %v315 = vld [vmem:[%s212 + $0x90] sm:$0xff]
      %v316 = vld [vmem:[%s212 + $0x98] sm:$0xff]
      %v317 = vld [vmem:[%s212 + $0xa0] sm:$0xff]
      %v318 = vld [vmem:[%s212 + $0xa8] sm:$0xff]
      %v319 = vld [vmem:[%s212 + $0xb0] sm:$0xff]
      %v320 = vld [vmem:[%s212 + $0xb8] sm:$0xff]
      %v321 = vld [vmem:[%s212 + $0xc0] sm:$0xff]
      %v322 = vld [vmem:[%s212 + $0xc8] sm:$0xff]
      %v323 = vld [vmem:[%s212 + $0xd0] sm:$0xff]
      %v324 = vld [vmem:[%s212 + $0xd8] sm:$0xff]
      %v325 = vld [vmem:[%s212 + $0xe0] sm:$0xff]
      %v326 = vld [vmem:[%s212 + $0xe8] sm:$0xff]
      %v327 = vld [vmem:[%s212 + $0xf0] sm:$0xff]
      %v328 = vld [vmem:[%s212 + $0xf8] sm:$0xff]
      %v329 = vld [vmem:[%s219] sm:$0xf]
      %v330 = vld [vmem:[%s219 + $0x4] sm:$0xf]
      %v331 = vld [vmem:[%s219 + $0x8] sm:$0xf]
      %v332 = vld [vmem:[%s219 + $0xc] sm:$0xf]
      %v333 = vld [vmem:[%s219 + $0x10] sm:$0xf]
      %v334 = vld [vmem:[%s219 + $0x14] sm:$0xf]
      %v335 = vld [vmem:[%s219 + $0x18] sm:$0xf]
      %v336 = vld [vmem:[%s219 + $0x1c] sm:$0xf]
      %v337 = vld [vmem:[%s219 + $0x20] sm:$0xf]
      %v338 = vld [vmem:[%s219 + $0x24] sm:$0xf]
      %v339 = vld [vmem:[%s219 + $0x28] sm:$0xf]
      %v340 = vld [vmem:[%s219 + $0x2c] sm:$0xf]
      %v341 = vld [vmem:[%s219 + $0x30] sm:$0xf]
      %v342 = vld [vmem:[%s219 + $0x34] sm:$0xf]
      %v343 = vld [vmem:[%s219 + $0x38] sm:$0xf]
      %v344 = vld [vmem:[%s219 + $0x3c] sm:$0xf]
      %v345 = vld [vmem:[%s219 + $0x40] sm:$0xf]
      %v346 = vld [vmem:[%s219 + $0x44] sm:$0xf]
      %v347 = vld [vmem:[%s219 + $0x48] sm:$0x3]
      %v380 = vunpack.c.l.b16 %v297
      %v381 = vunpack.c.h.b16 %v297
      %v382 = vunpack.c.l.b16 %v298
      %v383 = vunpack.c.h.b16 %v298
      %v384 = vunpack.c.l.b16 %v299
      %v385 = vunpack.c.h.b16 %v299
      %v386 = vunpack.c.l.b16 %v300
      %v387 = vunpack.c.h.b16 %v300
      %v388 = vunpack.c.l.b16 %v301
      %v389 = vunpack.c.h.b16 %v301
      %v390 = vunpack.c.l.b16 %v302
      %v391 = vunpack.c.h.b16 %v302
      %v392 = vunpack.c.l.b16 %v303
      %v393 = vunpack.c.h.b16 %v303
      %v394 = vunpack.c.l.b16 %v304
      %v395 = vunpack.c.h.b16 %v304
      %v396 = vunpack.c.l.b16 %v305
      %v397 = vunpack.c.h.b16 %v305
      %v398 = vunpack.c.l.b16 %v306
      %v399 = vunpack.c.h.b16 %v306
      %v400 = vunpack.c.l.b16 %v307
      %v401 = vunpack.c.h.b16 %v307
      %v402 = vunpack.c.l.b16 %v308
      %v403 = vunpack.c.h.b16 %v308
      %v404 = vunpack.c.l.b16 %v309
      %v405 = vunpack.c.h.b16 %v309
      %v406 = vunpack.c.l.b16 %v310
      %v407 = vunpack.c.h.b16 %v310
      %v408 = vunpack.c.l.b16 %v311
      %v409 = vunpack.c.h.b16 %v311
      %v410 = vunpack.c.l.b16 %v312
      %v411 = vunpack.c.h.b16 %v312
      %v412 = vunpack.c.l.b16 %v313
      %v413 = vunpack.c.h.b16 %v313
      %v414 = vunpack.c.l.b16 %v314
      %v415 = vunpack.c.h.b16 %v314
      %v416 = vunpack.c.l.b16 %v315
      %v417 = vunpack.c.h.b16 %v315
      %v418 = vunpack.c.l.b16 %v316
      %v419 = vunpack.c.h.b16 %v316
      %v420 = vunpack.c.l.b16 %v317
      %v421 = vunpack.c.h.b16 %v317
      %v422 = vunpack.c.l.b16 %v318
      %v423 = vunpack.c.h.b16 %v318
      %v424 = vunpack.c.l.b16 %v319
      %v425 = vunpack.c.h.b16 %v319
      %v426 = vunpack.c.l.b16 %v320
      %v427 = vunpack.c.h.b16 %v320
      %v428 = vunpack.c.l.b16 %v321
      %v429 = vunpack.c.h.b16 %v321
      %v430 = vunpack.c.l.b16 %v322
      %v431 = vunpack.c.h.b16 %v322
      %v432 = vunpack.c.l.b16 %v323
      %v433 = vunpack.c.h.b16 %v323
      %v434 = vunpack.c.l.b16 %v324
      %v435 = vunpack.c.h.b16 %v324
      %v436 = vunpack.c.l.b16 %v325
      %v437 = vunpack.c.h.b16 %v325
      %v438 = vunpack.c.l.b16 %v326
      %v439 = vunpack.c.h.b16 %v326
      %v440 = vunpack.c.l.b16 %v327
      %v441 = vunpack.c.h.b16 %v327
      %v442 = vunpack.c.l.b16 %v328
      %v443 = vunpack.c.h.b16 %v328
      %v444 = vpack.c.b16 %v382, %v380
      %v445 = vpack.c.b16 %v383, %v381
      %v446 = vpack.c.b16 %v386, %v384
      %v447 = vpack.c.b16 %v387, %v385
      %v448 = vpack.c.b16 %v390, %v388
      %v449 = vpack.c.b16 %v391, %v389
      %v450 = vpack.c.b16 %v394, %v392
      %v451 = vpack.c.b16 %v395, %v393
      %v452 = vpack.c.b16 %v398, %v396
      %v453 = vpack.c.b16 %v399, %v397
      %v454 = vpack.c.b16 %v402, %v400
      %v455 = vpack.c.b16 %v403, %v401
      %v456 = vpack.c.b16 %v406, %v404
      %v457 = vpack.c.b16 %v407, %v405
      %v458 = vpack.c.b16 %v410, %v408
      %v459 = vpack.c.b16 %v411, %v409
      %v460 = vpack.c.b16 %v414, %v412
      %v461 = vpack.c.b16 %v415, %v413
      %v462 = vpack.c.b16 %v418, %v416
      %v463 = vpack.c.b16 %v419, %v417
      %v464 = vpack.c.b16 %v422, %v420
      %v465 = vpack.c.b16 %v423, %v421
      %v466 = vpack.c.b16 %v426, %v424
      %v467 = vpack.c.b16 %v427, %v425
      %v468 = vpack.c.b16 %v430, %v428
      %v469 = vpack.c.b16 %v431, %v429
      %v470 = vpack.c.b16 %v434, %v432
      %v471 = vpack.c.b16 %v435, %v433
      %v472 = vpack.c.b16 %v438, %v436
      %v473 = vpack.c.b16 %v439, %v437
      %v474 = vpack.c.b16 %v442, %v440
      %v475 = vpack.c.b16 %v443, %v441
      %v511 = vunpack.c.l.b16 %v329
      %v512 = vunpack.c.l.b16 %v330
      %v513 = vunpack.c.l.b16 %v331
      %v514 = vunpack.c.l.b16 %v332
      %v515 = vunpack.c.l.b16 %v333
      %v516 = vunpack.c.l.b16 %v334
      %v517 = vunpack.c.l.b16 %v335
      %v518 = vunpack.c.l.b16 %v336
      %v519 = vunpack.c.l.b16 %v337
      %v520 = vunpack.c.l.b16 %v338
      %v521 = vunpack.c.l.b16 %v339
      %v522 = vunpack.c.l.b16 %v340
      %v523 = vunpack.c.l.b16 %v341
      %v524 = vunpack.c.l.b16 %v342
      %v525 = vunpack.c.l.b16 %v343
      %v526 = vunpack.c.l.b16 %v344
      %v527 = vunpack.c.l.b16 %v345
      %v528 = vunpack.c.l.b16 %v346
      %v529 = vunpack.c.l.b16 %v347
      %v530 = vpack.c.b16 %v512, %v511
      %v531 = vpack.c.b16 %v514, %v513
      %v532 = vpack.c.b16 %v516, %v515
      %v533 = vpack.c.b16 %v518, %v517
      %v534 = vpack.c.b16 %v520, %v519
      %v535 = vpack.c.b16 %v522, %v521
      %v536 = vpack.c.b16 %v524, %v523
      %v537 = vpack.c.b16 %v526, %v525
      %v538 = vpack.c.b16 %v528, %v527
      %v539 = vpack.c.b16 %v529, %v529
      %vm549 = vcmask 154624
      %v551 = vsel %vm549, %v445, 0
      %v554 = vsel %vm549, %v447, 0
      %v557 = vsel %vm549, %v449, 0
      %v560 = vsel %vm549, %v451, 0
      %v563 = vsel %vm549, %v453, 0
      %v566 = vsel %vm549, %v455, 0
      %v569 = vsel %vm549, %v457, 0
      %v572 = vsel %vm549, %v459, 0
      %v575 = vsel %vm549, %v461, 0
      %v578 = vsel %vm549, %v463, 0
      %v581 = vsel %vm549, %v465, 0
      %v584 = vsel %vm549, %v467, 0
      %v587 = vsel %vm549, %v469, 0
      %v590 = vsel %vm549, %v471, 0
      %v593 = vsel %vm549, %v473, 0
      %v596 = vsel %vm549, %v475, 0
      %vm598 = vcmask 1040384
      %vm599 = vcmask 1041408
      %v600 = vsel %vm598, 4294967295, 65535
      %v601 = vsel %vm599, %v600, 0
      %v603 = vand.u32 %v539, %v601
      %605 = vmatpush.bf16.msra.mxu0 %v537
      %606 = vmatpush.bf16.msra.mxu0 %v536
      %607 = vmatpush.bf16.msra.mxu0 %v535
      %608 = vmatpush.bf16.msra.mxu0 %v534
      %609 = vmatpush.bf16.msra.mxu0 %v533
      %610 = vmatpush.bf16.msra.mxu0 %v532
      %611 = vmatpush.bf16.msra.mxu0 %v531
      %612 = vmatpush.bf16.msra.mxu0 %v530
      %613 = vmatmul.bf16.gmra.mxu0 %v444
      %v614 = vpop.f32.mrf.mxu0
      %v615 = vadd.f32 0.0, %v614
      %v616 = vpop.f32.mrf.mxu0
      %v617 = vadd.f32 0.0, %v616
      %618 = vmatmul.bf16.gmra.mxu0 %v446
      %v619 = vpop.f32.mrf.mxu0
      %v620 = vadd.f32 0.0, %v619
      %v621 = vpop.f32.mrf.mxu0
      %v622 = vadd.f32 0.0, %v621
      %623 = vmatmul.bf16.gmra.mxu0 %v448
      %v624 = vpop.f32.mrf.mxu0
      %v625 = vadd.f32 0.0, %v624
      %v626 = vpop.f32.mrf.mxu0
      %v627 = vadd.f32 0.0, %v626
      %628 = vmatmul.bf16.gmra.mxu0 %v450
      %v629 = vpop.f32.mrf.mxu0
      %v630 = vadd.f32 0.0, %v629
      %v631 = vpop.f32.mrf.mxu0
      %v632 = vadd.f32 0.0, %v631
      %633 = vmatmul.bf16.gmra.mxu0 %v452
      %v634 = vpop.f32.mrf.mxu0
      %v635 = vadd.f32 0.0, %v634
      %v636 = vpop.f32.mrf.mxu0
      %v637 = vadd.f32 0.0, %v636
      %638 = vmatmul.bf16.gmra.mxu0 %v454
      %v639 = vpop.f32.mrf.mxu0
      %v640 = vadd.f32 0.0, %v639
      %v641 = vpop.f32.mrf.mxu0
      %v642 = vadd.f32 0.0, %v641
      %643 = vmatmul.bf16.gmra.mxu0 %v456
      %v644 = vpop.f32.mrf.mxu0
      %v645 = vadd.f32 0.0, %v644
      %v646 = vpop.f32.mrf.mxu0
      %v647 = vadd.f32 0.0, %v646
      %648 = vmatmul.bf16.gmra.mxu0 %v458
      %v649 = vpop.f32.mrf.mxu0
      %v650 = vadd.f32 0.0, %v649
      %v651 = vpop.f32.mrf.mxu0
      %v652 = vadd.f32 0.0, %v651
      %653 = vmatmul.bf16.gmra.mxu0 %v460
      %v654 = vpop.f32.mrf.mxu0
      %v655 = vadd.f32 0.0, %v654
      %v656 = vpop.f32.mrf.mxu0
      %v657 = vadd.f32 0.0, %v656
      %658 = vmatmul.bf16.gmra.mxu0 %v462
      %v659 = vpop.f32.mrf.mxu0
      %v660 = vadd.f32 0.0, %v659
      %v661 = vpop.f32.mrf.mxu0
      %v662 = vadd.f32 0.0, %v661
      %663 = vmatmul.bf16.gmra.mxu0 %v464
      %v664 = vpop.f32.mrf.mxu0
      %v665 = vadd.f32 0.0, %v664
      %v666 = vpop.f32.mrf.mxu0
      %v667 = vadd.f32 0.0, %v666
      %668 = vmatmul.bf16.gmra.mxu0 %v466
      %v669 = vpop.f32.mrf.mxu0
      %v670 = vadd.f32 0.0, %v669
      %v671 = vpop.f32.mrf.mxu0
      %v672 = vadd.f32 0.0, %v671
      %673 = vmatmul.bf16.gmra.mxu0 %v468
      %v674 = vpop.f32.mrf.mxu0
      %v675 = vadd.f32 0.0, %v674
      %v676 = vpop.f32.mrf.mxu0
      %v677 = vadd.f32 0.0, %v676
      %678 = vmatmul.bf16.gmra.mxu0 %v470
      %v679 = vpop.f32.mrf.mxu0
      %v680 = vadd.f32 0.0, %v679
      %v681 = vpop.f32.mrf.mxu0
      %v682 = vadd.f32 0.0, %v681
      %683 = vmatmul.bf16.gmra.mxu0 %v472
      %v684 = vpop.f32.mrf.mxu0
      %v685 = vadd.f32 0.0, %v684
      %v686 = vpop.f32.mrf.mxu0
      %v687 = vadd.f32 0.0, %v686
      %688 = vmatmul.bf16.gmra.mxu0 %v474
      %v689 = vpop.f32.mrf.mxu0
      %v690 = vadd.f32 0.0, %v689
      %v691 = vpop.f32.mrf.mxu0
      %v692 = vadd.f32 0.0, %v691
      %693 = vdwg.mxu0
      %694 = vmatpush.bf16.msra.mxu0 0
      %695 = vmatpush.bf16.msra.mxu0 0
      %696 = vmatpush.bf16.msra.mxu0 0
      %697 = vmatpush.bf16.msra.mxu0 0
      %698 = vmatpush.bf16.msra.mxu0 0
      %699 = vmatpush.bf16.msra.mxu0 0
      %700 = vmatpush.bf16.msra.mxu0 %v603
      %701 = vmatpush.bf16.msra.mxu0 %v538
      %702 = vmatmul.bf16.gmra.mxu0 %v551
      %v703 = vpop.f32.mrf.mxu0
      %v704 = vadd.f32 %v615, %v703
      %v705 = vpop.f32.mrf.mxu0
      %v706 = vadd.f32 %v617, %v705
      %707 = vmatmul.bf16.gmra.mxu0 %v554
      %v708 = vpop.f32.mrf.mxu0
      %v709 = vadd.f32 %v620, %v708
      %v710 = vpop.f32.mrf.mxu0
      %v711 = vadd.f32 %v622, %v710
      %712 = vmatmul.bf16.gmra.mxu0 %v557
      %v713 = vpop.f32.mrf.mxu0
      %v714 = vadd.f32 %v625, %v713
      %v715 = vpop.f32.mrf.mxu0
      %v716 = vadd.f32 %v627, %v715
      %717 = vmatmul.bf16.gmra.mxu0 %v560
      %v718 = vpop.f32.mrf.mxu0
      %v719 = vadd.f32 %v630, %v718
      %v720 = vpop.f32.mrf.mxu0
      %v721 = vadd.f32 %v632, %v720
      %722 = vmatmul.bf16.gmra.mxu0 %v563
      %v723 = vpop.f32.mrf.mxu0
      %v724 = vadd.f32 %v635, %v723
      %v725 = vpop.f32.mrf.mxu0
      %v726 = vadd.f32 %v637, %v725
      %727 = vmatmul.bf16.gmra.mxu0 %v566
      %v728 = vpop.f32.mrf.mxu0
      %v729 = vadd.f32 %v640, %v728
      %v730 = vpop.f32.mrf.mxu0
      %v731 = vadd.f32 %v642, %v730
      %732 = vmatmul.bf16.gmra.mxu0 %v569
      %v733 = vpop.f32.mrf.mxu0
      %v734 = vadd.f32 %v645, %v733
      %v735 = vpop.f32.mrf.mxu0
      %v736 = vadd.f32 %v647, %v735
      %737 = vmatmul.bf16.gmra.mxu0 %v572
      %v738 = vpop.f32.mrf.mxu0
      %v739 = vadd.f32 %v650, %v738
      %v740 = vpop.f32.mrf.mxu0
      %v741 = vadd.f32 %v652, %v740
      %742 = vmatmul.bf16.gmra.mxu0 %v575
      %v743 = vpop.f32.mrf.mxu0
      %v744 = vadd.f32 %v655, %v743
      %v745 = vpop.f32.mrf.mxu0
      %v746 = vadd.f32 %v657, %v745
      %747 = vmatmul.bf16.gmra.mxu0 %v578
      %v748 = vpop.f32.mrf.mxu0
      %v749 = vadd.f32 %v660, %v748
      %v750 = vpop.f32.mrf.mxu0
      %v751 = vadd.f32 %v662, %v750
      %752 = vmatmul.bf16.gmra.mxu0 %v581
      %v753 = vpop.f32.mrf.mxu0
      %v754 = vadd.f32 %v665, %v753
      %v755 = vpop.f32.mrf.mxu0
      %v756 = vadd.f32 %v667, %v755
      %757 = vmatmul.bf16.gmra.mxu0 %v584
      %v758 = vpop.f32.mrf.mxu0
      %v759 = vadd.f32 %v670, %v758
      %v760 = vpop.f32.mrf.mxu0
      %v761 = vadd.f32 %v672, %v760
      %762 = vmatmul.bf16.gmra.mxu0 %v587
      %v763 = vpop.f32.mrf.mxu0
      %v764 = vadd.f32 %v675, %v763
      %v765 = vpop.f32.mrf.mxu0
      %v766 = vadd.f32 %v677, %v765
      %767 = vmatmul.bf16.gmra.mxu0 %v590
      %v768 = vpop.f32.mrf.mxu0
      %v769 = vadd.f32 %v680, %v768
      %v770 = vpop.f32.mrf.mxu0
      %v771 = vadd.f32 %v682, %v770
      %772 = vmatmul.bf16.gmra.mxu0 %v593
      %v773 = vpop.f32.mrf.mxu0
      %v774 = vadd.f32 %v685, %v773
      %v775 = vpop.f32.mrf.mxu0
      %v776 = vadd.f32 %v687, %v775
      %777 = vmatmul.bf16.gmra.mxu0 %v596
      %v778 = vpop.f32.mrf.mxu0
      %v779 = vadd.f32 %v690, %v778
      %v780 = vpop.f32.mrf.mxu0
      %v781 = vadd.f32 %v692, %v780
      %782 = vdwg.mxu0
      %v783 = vadd.f32 %v265, %v704
      %v784 = vadd.f32 %v266, %v706
      %v785 = vadd.f32 %v267, %v709
      %v786 = vadd.f32 %v268, %v711
      %v787 = vadd.f32 %v269, %v714
      %v788 = vadd.f32 %v270, %v716
      %v789 = vadd.f32 %v271, %v719
      %v790 = vadd.f32 %v272, %v721
      %v791 = vadd.f32 %v273, %v724
      %v792 = vadd.f32 %v274, %v726
      %v793 = vadd.f32 %v275, %v729
      %v794 = vadd.f32 %v276, %v731
      %v795 = vadd.f32 %v277, %v734
      %v796 = vadd.f32 %v278, %v736
      %v797 = vadd.f32 %v279, %v739
      %v798 = vadd.f32 %v280, %v741
      %v799 = vadd.f32 %v281, %v744
      %v800 = vadd.f32 %v282, %v746
      %v801 = vadd.f32 %v283, %v749
      %v802 = vadd.f32 %v284, %v751
      %v803 = vadd.f32 %v285, %v754
      %v804 = vadd.f32 %v286, %v756
      %v805 = vadd.f32 %v287, %v759
      %v806 = vadd.f32 %v288, %v761
      %v807 = vadd.f32 %v289, %v764
      %v808 = vadd.f32 %v290, %v766
      %v809 = vadd.f32 %v291, %v769
      %v810 = vadd.f32 %v292, %v771
      %v811 = vadd.f32 %v293, %v774
      %v812 = vadd.f32 %v294, %v776
      %v813 = vadd.f32 %v295, %v779
      %v814 = vadd.f32 %v296, %v781
      %vm815 = vcmask 523264
      %816 = vst.msk [vmem:[#allocation2] sm:$0xff] %vm815, %v783
      %817 = vst.msk [vmem:[#allocation2 + $0x8] sm:$0xff] %vm815, %v784
      %818 = vst.msk [vmem:[#allocation2 + $0x10] sm:$0xff] %vm815, %v785
      %819 = vst.msk [vmem:[#allocation2 + $0x18] sm:$0xff] %vm815, %v786
      %820 = vst.msk [vmem:[#allocation2 + $0x20] sm:$0xff] %vm815, %v787
      %821 = vst.msk [vmem:[#allocation2 + $0x28] sm:$0xff] %vm815, %v788
      %822 = vst.msk [vmem:[#allocation2 + $0x30] sm:$0xff] %vm815, %v789
      %823 = vst.msk [vmem:[#allocation2 + $0x38] sm:$0xff] %vm815, %v790
      %824 = vst.msk [vmem:[#allocation2 + $0x40] sm:$0xff] %vm815, %v791
      %825 = vst.msk [vmem:[#allocation2 + $0x48] sm:$0xff] %vm815, %v792
      %826 = vst.msk [vmem:[#allocation2 + $0x50] sm:$0xff] %vm815, %v793
      %827 = vst.msk [vmem:[#allocation2 + $0x58] sm:$0xff] %vm815, %v794
      %828 = vst.msk [vmem:[#allocation2 + $0x60] sm:$0xff] %vm815, %v795
      %829 = vst.msk [vmem:[#allocation2 + $0x68] sm:$0xff] %vm815, %v796
      %830 = vst.msk [vmem:[#allocation2 + $0x70] sm:$0xff] %vm815, %v797
      %831 = vst.msk [vmem:[#allocation2 + $0x78] sm:$0xff] %vm815, %v798
      %832 = vst.msk [vmem:[#allocation2 + $0x80] sm:$0xff] %vm815, %v799
      %833 = vst.msk [vmem:[#allocation2 + $0x88] sm:$0xff] %vm815, %v800
      %834 = vst.msk [vmem:[#allocation2 + $0x90] sm:$0xff] %vm815, %v801
      %835 = vst.msk [vmem:[#allocation2 + $0x98] sm:$0xff] %vm815, %v802
      %836 = vst.msk [vmem:[#allocation2 + $0xa0] sm:$0xff] %vm815, %v803
      %837 = vst.msk [vmem:[#allocation2 + $0xa8] sm:$0xff] %vm815, %v804
      %838 = vst.msk [vmem:[#allocation2 + $0xb0] sm:$0xff] %vm815, %v805
      %839 = vst.msk [vmem:[#allocation2 + $0xb8] sm:$0xff] %vm815, %v806
      %840 = vst.msk [vmem:[#allocation2 + $0xc0] sm:$0xff] %vm815, %v807
      %841 = vst.msk [vmem:[#allocation2 + $0xc8] sm:$0xff] %vm815, %v808
      %842 = vst.msk [vmem:[#allocation2 + $0xd0] sm:$0xff] %vm815, %v809
      %843 = vst.msk [vmem:[#allocation2 + $0xd8] sm:$0xff] %vm815, %v810
      %844 = vst.msk [vmem:[#allocation2 + $0xe0] sm:$0xff] %vm815, %v811
      %845 = vst.msk [vmem:[#allocation2 + $0xe8] sm:$0xff] %vm815, %v812
      %846 = vst.msk [vmem:[#allocation2 + $0xf0] sm:$0xff] %vm815, %v813
      %847 = vst.msk [vmem:[#allocation2 + $0xf8] sm:$0xff] %vm815, %v814
      // Predicated region
      $region37: #{tpu_custom_call.1} parent=31 // pred_check
        %p848 = pneg %p228
      $region38: #{tpu_custom_call.1} parent=31 // pred_check_branch
        %850 = sbr.rel (%p848) target = $region40
      $region39: #{tpu_custom_call.1} parent=31 // pred_region
        %v851 = vld [vmem:[#allocation2] sm:$0xff]
        %v852 = vld [vmem:[#allocation2 + $0x8] sm:$0xff]
        %v853 = vld [vmem:[#allocation2 + $0x10] sm:$0xff]
        %v854 = vld [vmem:[#allocation2 + $0x18] sm:$0xff]
        %v855 = vld [vmem:[#allocation2 + $0x20] sm:$0xff]
        %v856 = vld [vmem:[#allocation2 + $0x28] sm:$0xff]
        %v857 = vld [vmem:[#allocation2 + $0x30] sm:$0xff]
        %v858 = vld [vmem:[#allocation2 + $0x38] sm:$0xff]
        %v859 = vld [vmem:[#allocation2 + $0x40] sm:$0xff]
        %v860 = vld [vmem:[#allocation2 + $0x48] sm:$0xff]
        %v861 = vld [vmem:[#allocation2 + $0x50] sm:$0xff]
        %v862 = vld [vmem:[#allocation2 + $0x58] sm:$0xff]
        %v863 = vld [vmem:[#allocation2 + $0x60] sm:$0xff]
        %v864 = vld [vmem:[#allocation2 + $0x68] sm:$0xff]
        %v865 = vld [vmem:[#allocation2 + $0x70] sm:$0xff]
        %v866 = vld [vmem:[#allocation2 + $0x78] sm:$0xff]
        %v867 = vld [vmem:[#allocation2 + $0x80] sm:$0xff]
        %v868 = vld [vmem:[#allocation2 + $0x88] sm:$0xff]
        %v869 = vld [vmem:[#allocation2 + $0x90] sm:$0xff]
        %v870 = vld [vmem:[#allocation2 + $0x98] sm:$0xff]
        %v871 = vld [vmem:[#allocation2 + $0xa0] sm:$0xff]
        %v872 = vld [vmem:[#allocation2 + $0xa8] sm:$0xff]
        %v873 = vld [vmem:[#allocation2 + $0xb0] sm:$0xff]
        %v874 = vld [vmem:[#allocation2 + $0xb8] sm:$0xff]
        %v875 = vld [vmem:[#allocation2 + $0xc0] sm:$0xff]
        %v876 = vld [vmem:[#allocation2 + $0xc8] sm:$0xff]
        %v877 = vld [vmem:[#allocation2 + $0xd0] sm:$0xff]
        %v878 = vld [vmem:[#allocation2 + $0xd8] sm:$0xff]
        %v879 = vld [vmem:[#allocation2 + $0xe0] sm:$0xff]
        %v880 = vld [vmem:[#allocation2 + $0xe8] sm:$0xff]
        %v881 = vld [vmem:[#allocation2 + $0xf0] sm:$0xff]
        %v882 = vld [vmem:[#allocation2 + $0xf8] sm:$0xff]
        %v883 = vld [vmem:[%s2] sm:$0x1]
        %v885 = vperm.slane %v883, 0
        %v887 = vadd.f32 %v851, %v885
        %v888 = vadd.f32 %v852, %v885
        %v889 = vadd.f32 %v853, %v885
        %v890 = vadd.f32 %v854, %v885
        %v891 = vadd.f32 %v855, %v885
        %v892 = vadd.f32 %v856, %v885
        %v893 = vadd.f32 %v857, %v885
        %v894 = vadd.f32 %v858, %v885
        %v895 = vadd.f32 %v859, %v885
        %v896 = vadd.f32 %v860, %v885
        %v897 = vadd.f32 %v861, %v885
        %v898 = vadd.f32 %v862, %v885
        %v899 = vadd.f32 %v863, %v885
        %v900 = vadd.f32 %v864, %v885
        %v901 = vadd.f32 %v865, %v885
        %v902 = vadd.f32 %v866, %v885
        %v903 = vadd.f32 %v867, %v885
        %v904 = vadd.f32 %v868, %v885
        %v905 = vadd.f32 %v869, %v885
        %v906 = vadd.f32 %v870, %v885
        %v907 = vadd.f32 %v871, %v885
        %v908 = vadd.f32 %v872, %v885
        %v909 = vadd.f32 %v873, %v885
        %v910 = vadd.f32 %v874, %v885
        %v911 = vadd.f32 %v875, %v885
        %v912 = vadd.f32 %v876, %v885
        %v913 = vadd.f32 %v877, %v885
        %v914 = vadd.f32 %v878, %v885
        %v915 = vadd.f32 %v879, %v885
        %v916 = vadd.f32 %v880, %v885
        %v917 = vadd.f32 %v881, %v885
        %v918 = vadd.f32 %v882, %v885
        %v919 = vmax.f32 %v887, 0.0
        %v920 = vmax.f32 %v888, 0.0
        %v921 = vmax.f32 %v889, 0.0
        %v922 = vmax.f32 %v890, 0.0
        %v923 = vmax.f32 %v891, 0.0
        %v924 = vmax.f32 %v892, 0.0
        %v925 = vmax.f32 %v893, 0.0
        %v926 = vmax.f32 %v894, 0.0
        %v927 = vmax.f32 %v895, 0.0
        %v928 = vmax.f32 %v896, 0.0
        %v929 = vmax.f32 %v897, 0.0
        %v930 = vmax.f32 %v898, 0.0
        %v931 = vmax.f32 %v899, 0.0
        %v932 = vmax.f32 %v900, 0.0
        %v933 = vmax.f32 %v901, 0.0
        %v934 = vmax.f32 %v902, 0.0
        %v935 = vmax.f32 %v903, 0.0
        %v936 = vmax.f32 %v904, 0.0
        %v937 = vmax.f32 %v905, 0.0
        %v938 = vmax.f32 %v906, 0.0
        %v939 = vmax.f32 %v907, 0.0
        %v940 = vmax.f32 %v908, 0.0
        %v941 = vmax.f32 %v909, 0.0
        %v942 = vmax.f32 %v910, 0.0
        %v943 = vmax.f32 %v911, 0.0
        %v944 = vmax.f32 %v912, 0.0
        %v945 = vmax.f32 %v913, 0.0
        %v946 = vmax.f32 %v914, 0.0
        %v947 = vmax.f32 %v915, 0.0
        %v948 = vmax.f32 %v916, 0.0
        %v949 = vmax.f32 %v917, 0.0
        %v950 = vmax.f32 %v918, 0.0
        %v951 = vpack.c.bf16 %v919, %v919
        %v952 = vpack.c.bf16 %v920, %v920
        %v953 = vpack.c.bf16 %v921, %v921
        %v954 = vpack.c.bf16 %v922, %v922
        %v955 = vpack.c.bf16 %v923, %v923
        %v956 = vpack.c.bf16 %v924, %v924
        %v957 = vpack.c.bf16 %v925, %v925
        %v958 = vpack.c.bf16 %v926, %v926
        %v959 = vpack.c.bf16 %v927, %v927
        %v960 = vpack.c.bf16 %v928, %v928
        %v961 = vpack.c.bf16 %v929, %v929
        %v962 = vpack.c.bf16 %v930, %v930
        %v963 = vpack.c.bf16 %v931, %v931
        %v964 = vpack.c.bf16 %v932, %v932
        %v965 = vpack.c.bf16 %v933, %v933
        %v966 = vpack.c.bf16 %v934, %v934
        %v967 = vpack.c.bf16 %v935, %v935
        %v968 = vpack.c.bf16 %v936, %v936
        %v969 = vpack.c.bf16 %v937, %v937
        %v970 = vpack.c.bf16 %v938, %v938
        %v971 = vpack.c.bf16 %v939, %v939
        %v972 = vpack.c.bf16 %v940, %v940
        %v973 = vpack.c.bf16 %v941, %v941
        %v974 = vpack.c.bf16 %v942, %v942
        %v975 = vpack.c.bf16 %v943, %v943
        %v976 = vpack.c.bf16 %v944, %v944
        %v977 = vpack.c.bf16 %v945, %v945
        %v978 = vpack.c.bf16 %v946, %v946
        %v979 = vpack.c.bf16 %v947, %v947
        %v980 = vpack.c.bf16 %v948, %v948
        %v981 = vpack.c.bf16 %v949, %v949
        %v982 = vpack.c.bf16 %v950, %v950
        %vm983 = vcmask 519168
        %984 = vst.msk [vmem:[%s225] sm:$0xf] %vm983, %v951
        %985 = vst.msk [vmem:[%s225 + $0x4] sm:$0xf] %vm983, %v952
        %986 = vst.msk [vmem:[%s225 + $0x8] sm:$0xf] %vm983, %v953
        %987 = vst.msk [vmem:[%s225 + $0xc] sm:$0xf] %vm983, %v954
        %988 = vst.msk [vmem:[%s225 + $0x10] sm:$0xf] %vm983, %v955
        %989 = vst.msk [vmem:[%s225 + $0x14] sm:$0xf] %vm983, %v956
        %990 = vst.msk [vmem:[%s225 + $0x18] sm:$0xf] %vm983, %v957
        %991 = vst.msk [vmem:[%s225 + $0x1c] sm:$0xf] %vm983, %v958
        %992 = vst.msk [vmem:[%s225 + $0x20] sm:$0xf] %vm983, %v959
        %993 = vst.msk [vmem:[%s225 + $0x24] sm:$0xf] %vm983, %v960
        %994 = vst.msk [vmem:[%s225 + $0x28] sm:$0xf] %vm983, %v961
        %995 = vst.msk [vmem:[%s225 + $0x2c] sm:$0xf] %vm983, %v962
        %996 = vst.msk [vmem:[%s225 + $0x30] sm:$0xf] %vm983, %v963
        %997 = vst.msk [vmem:[%s225 + $0x34] sm:$0xf] %vm983, %v964
        %998 = vst.msk [vmem:[%s225 + $0x38] sm:$0xf] %vm983, %v965
        %999 = vst.msk [vmem:[%s225 + $0x3c] sm:$0xf] %vm983, %v966
        %1000 = vst.msk [vmem:[%s225 + $0x40] sm:$0xf] %vm983, %v967
        %1001 = vst.msk [vmem:[%s225 + $0x44] sm:$0xf] %vm983, %v968
        %1002 = vst.msk [vmem:[%s225 + $0x48] sm:$0xf] %vm983, %v969
        %1003 = vst.msk [vmem:[%s225 + $0x4c] sm:$0xf] %vm983, %v970
        %1004 = vst.msk [vmem:[%s225 + $0x50] sm:$0xf] %vm983, %v971
        %1005 = vst.msk [vmem:[%s225 + $0x54] sm:$0xf] %vm983, %v972
        %1006 = vst.msk [vmem:[%s225 + $0x58] sm:$0xf] %vm983, %v973
        %1007 = vst.msk [vmem:[%s225 + $0x5c] sm:$0xf] %vm983, %v974
        %1008 = vst.msk [vmem:[%s225 + $0x60] sm:$0xf] %vm983, %v975
        %1009 = vst.msk [vmem:[%s225 + $0x64] sm:$0xf] %vm983, %v976
        %1010 = vst.msk [vmem:[%s225 + $0x68] sm:$0xf] %vm983, %v977
        %1011 = vst.msk [vmem:[%s225 + $0x6c] sm:$0xf] %vm983, %v978
        %1012 = vst.msk [vmem:[%s225 + $0x70] sm:$0xf] %vm983, %v979
        %1013 = vst.msk [vmem:[%s225 + $0x74] sm:$0xf] %vm983, %v980
        %1014 = vst.msk [vmem:[%s225 + $0x78] sm:$0xf] %vm983, %v981
        %1015 = vst.msk [vmem:[%s225 + $0x7c] sm:$0xf] %vm983, %v982
      $region40: #{tpu_custom_call.1} parent=31 // pred_fallthru
        _
      %s1016 = smul.u32 32, %s18
      %p1017 = scmp.lt.s32.totalorder %s1016, 63
      %s1018 = scalar_select %p1017, %s1016, 63
      %s1019 = smul.addr %s1018, 4
      %s1020 = scalar_lea.vmem %s3, %s1019
      // Predicated region
      $region41: #{tpu_custom_call.1} parent=31 // pred_check
        %p1021 = pneg %p119
      $region42: #{tpu_custom_call.1} parent=31 // pred_check_branch
        %1023 = sbr.rel (%p1021) target = $region44
      $region43: #{tpu_custom_call.1} parent=31 // pred_region
        %s1024 = smul.u32 32, %s18
      $region44: #{tpu_custom_call.1} parent=31 // pred_fallthru
        _
    $region32: #{tpu_custom_call.1} parent=5 // pred_fallthru
      _
    %p1025 = scmp.le.s32.totalorder 2, %s9
    // Predicated region
    $region45: #{tpu_custom_call.1} parent=5 // pred_check
      %p1026 = pneg %p1025
    $region46: #{tpu_custom_call.1} parent=5 // pred_check_branch
      %1028 = sbr.rel (%p1026) target = $region48
    $region47: #{tpu_custom_call.1} parent=5 // pred_region
      %s1029 = ssub.s32 %s9, 2
      // Predicated region
      $region49: #{tpu_custom_call.1} parent=47 // pred_check
        %p1030 = pneg %p125
      $region50: #{tpu_custom_call.1} parent=47 // pred_check_branch
        %1032 = sbr.rel (%p1030) target = $region52
      $region51: #{tpu_custom_call.1} parent=47 // pred_region
        %s1033 = smul.u32 32, %s20
        %p1034 = scmp.lt.s32.totalorder %s1033, 63
        %s1035 = scalar_select %p1034, %s1033, 63
        %s1036 = smul.addr %s1035, 4
        %s1037 = scalar_lea.vmem %s3, %s1036
      $region52: #{tpu_custom_call.1} parent=47 // pred_fallthru
        _
    $region48: #{tpu_custom_call.1} parent=5 // pred_fallthru
      _
  $region6: #{tpu_custom_call.1} parent=0 // loop_footer
    %s13 = sadd.s32 1, %s9
  $region7: #{tpu_custom_call.1} parent=0 // loop_footer_branch
    %8 = sbr.rel target = $region3
  $region8: #{tpu_custom_call.1} parent=0 // loop_exit
    _

</llo_original>
